<compile_context>
chip_gen: v7x
topology: tpu7x:2x2x1
jax: 0.10.0
libtpu: 0.0.40
codegen_flags: <defaults>
</compile_context>

<pallas_src>
import jax
import jax.numpy as jnp
from jax.experimental import pallas as pl
from jax.experimental.pallas import tpu as pltpu


def _mlp_kernel(x_ref, w1_ref, b1_ref, w2_ref, b2_ref, o_ref):
    # x_ref : (K_in, tn)   -- N (tile) on the lane axis
    # w1_ref: (K_h, K_in)  b1_ref: (K_h, 1)
    # w2_ref: (K_out, K_h) b2_ref: (K_out, 1)
    # o_ref : (K_out, tn)
    x = x_ref[...]
    # fc1 + bias + ReLU.  Dropout(p=0) is identity.  f32 accumulation on MXU.
    h = jnp.dot(w1_ref[...], x, preferred_element_type=jnp.float32)
    h = jnp.maximum(h + b1_ref[...].astype(jnp.float32), 0.0)
    # fc2 + bias.  Feed the MXU operands in the activation dtype.
    o = jnp.dot(w2_ref[...], h.astype(x.dtype), preferred_element_type=jnp.float32)
    o_ref[...] = (o + b2_ref[...].astype(jnp.float32)).astype(o_ref.dtype)


def _round_up(v, m):
    return ((v + m - 1) // m) * m


def _round_down_128(v):
    return max(128, (v // 128) * 128)


def mlp_forward(x, w1, b1, w2, b2, *, max_tn=None):
    """Fused Mlp forward in the native (B, C, N) layout.

    x : (B, C_in, N)
    w1: (H, C_in), b1: (H,), w2: (C_out, H), b2: (C_out,)
      (PyTorch Linear layout: weight is (out_features, in_features))
    Returns (B, C_out, N).
    """
    B, C_in, N = x.shape
    H = w1.shape[0]
    C_out = w2.shape[0]
    dtype = x.dtype
    isz = jnp.dtype(dtype).itemsize

    # --- Batch fold into sublane / contraction axes (free reshape + kron) ---
    fold = (B * H <= 128) and (B * C_in <= 128) and (B * C_out <= 128)
    if fold:
        w1k = jnp.kron(jnp.eye(B, dtype=w1.dtype), w1)      # (B*H, B*C_in)
        w2k = jnp.kron(jnp.eye(B, dtype=w2.dtype), w2)      # (B*C_out, B*H)
        b1k = jnp.tile(b1, B).reshape(B * H, 1)
        b2k = jnp.tile(b2, B).reshape(B * C_out, 1)
        x_in = x.reshape(B * C_in, N)                        # free view
        K_in, K_h, K_out = B * C_in, B * H, B * C_out
    else:
        w1k, b1k = w1, b1.reshape(H, 1)
        w2k, b2k = w2, b2.reshape(C_out, 1)
        x_in = x
        K_in, K_h, K_out = C_in, H, C_out

    # --- N-tile size from actual VMEM math (double-buffered in/out + f32 h) --
    bytes_per_lane = 2 * K_in * isz + 2 * K_h * 4 + 2 * K_out * isz
    budget = 12 << 20  # conservative even vs v5e's 16 MiB default scoped VMEM
    tn_cap = _round_down_128(min(32768, budget // bytes_per_lane))
    if max_tn is not None:
        tn_cap = min(tn_cap, _round_down_128(max_tn))

    if N <= tn_cap:
        # Single full-extent block: block dim == array dim, so no
        # 128-alignment, padding, or masking needed (one grid step for the
        # shipped tiny config).
        tn = N
    else:
        tn = tn_cap
    # v7x has 2 TensorCores: when the batch grid axis is folded away and there
    # is real work, make sure the parallel N axis has >= 2 grid steps.
    if fold and tn == N and N >= 4096:
        tn = _round_up(pl.cdiv(N, 2), 128)
    n_steps = pl.cdiv(N, tn)  # ragged last tile: Pallas masks OOB stores

    weight_bytes = (w1k.size + b1k.size + w2k.size + b2k.size) * isz
    footprint = bytes_per_lane * tn + 4 * weight_bytes
    vmem_limit = int(min(64 << 20, max(8 << 20, 2 * footprint)))

    if fold:
        grid = (n_steps,)
        in_specs = [
            pl.BlockSpec((K_in, tn), lambda n: (0, n)),      # activations
            pl.BlockSpec((K_h, K_in), lambda n: (0, 0)),     # resident weights
            pl.BlockSpec((K_h, 1), lambda n: (0, 0)),
            pl.BlockSpec((K_out, K_h), lambda n: (0, 0)),
            pl.BlockSpec((K_out, 1), lambda n: (0, 0)),
        ]
        out_specs = pl.BlockSpec((K_out, tn), lambda n: (0, n))
        out_shape = jax.ShapeDtypeStruct((K_out, N), dtype)
        dims = ("parallel",)
    else:
        grid = (B, n_steps)
        in_specs = [
            pl.BlockSpec((None, K_in, tn), lambda b, n: (b, 0, n)),
            pl.BlockSpec((K_h, K_in), lambda b, n: (0, 0)),
            pl.BlockSpec((K_h, 1), lambda b, n: (0, 0)),
            pl.BlockSpec((K_out, K_h), lambda b, n: (0, 0)),
            pl.BlockSpec((K_out, 1), lambda b, n: (0, 0)),
        ]
        out_specs = pl.BlockSpec((None, K_out, tn), lambda b, n: (b, 0, n))
        out_shape = jax.ShapeDtypeStruct((B, K_out, N), dtype)
        dims = ("parallel", "parallel")

    out = pl.pallas_call(
        _mlp_kernel,
        out_shape=out_shape,
        grid_spec=pltpu.PrefetchScalarGridSpec(
            num_scalar_prefetch=0,
            grid=grid,
            in_specs=in_specs,
            out_specs=out_specs,
        ),
        compiler_params=pltpu.CompilerParams(
            dimension_semantics=dims,
            vmem_limit_bytes=vmem_limit,
        ),
    )(x_in, w1k, b1k, w2k, b2k)

    return out.reshape(B, C_out, N) if fold else out


def mlp_reference(x, w1, b1, w2, b2):
    """Pure-JAX reference matching the PyTorch forward."""
    xt = jnp.transpose(x, (0, 2, 1))
    h = jnp.maximum(xt @ w1.T + b1, 0.0)
    o = h @ w2.T + b2
    return jnp.transpose(o, (0, 2, 1))


if __name__ == "__main__":
    # Module config: in_features=4, hidden_features=32, out_features=4
    B, C_in, N = 2, 4, 256
    H = 32
    C_out = C_in

    key = jax.random.PRNGKey(0)
    kx, k1, k2, k3, k4 = jax.random.split(key, 5)

    x = jax.random.normal(kx, (B, C_in, N), dtype=jnp.float32)
    # deterministic synthetic params (PyTorch Linear-like uniform init scale)
    w1 = jax.random.uniform(k1, (H, C_in), jnp.float32, -0.5, 0.5)
    b1 = jax.random.uniform(k2, (H,), jnp.float32, -0.5, 0.5)
    w2 = jax.random.uniform(k3, (C_out, H), jnp.float32, -0.2, 0.2)
    b2 = jax.random.uniform(k4, (C_out,), jnp.float32, -0.2, 0.2)

    out = jax.block_until_ready(mlp_forward(x, w1, b1, w2, b2))
    ref = mlp_reference(x, w1, b1, w2, b2)
    assert out.shape == (B, C_out, N), out.shape
    assert jnp.allclose(out, ref, atol=1e-5, rtol=1e-5), "mismatch vs reference"

    # N not a multiple of 128: handled as one full-extent block, no host-side
    # pad or slice.
    x2 = jax.random.normal(kx, (B, C_in, 200), dtype=jnp.float32)
    out2 = jax.block_until_ready(mlp_forward(x2, w1, b1, w2, b2))
    ref2 = mlp_reference(x2, w1, b1, w2, b2)
    assert out2.shape == (B, C_out, 200), out2.shape
    assert jnp.allclose(out2, ref2, atol=1e-5, rtol=1e-5), "mismatch (ragged N)"

    # Force multiple N tiles with a ragged last tile (exercises the masked
    # out-of-bounds store path that replaces the old pad + slice).
    x3 = jax.random.normal(kx, (B, C_in, 300), dtype=jnp.float32)
    out3 = jax.block_until_ready(mlp_forward(x3, w1, b1, w2, b2, max_tn=128))
    ref3 = mlp_reference(x3, w1, b1, w2, b2)
    assert out3.shape == (B, C_out, 300), out3.shape
    assert jnp.allclose(out3, ref3, atol=1e-5, rtol=1e-5), "mismatch (ragged tile)"

    print("KERNEL_OK")
</pallas_src>

<mosaic_0001>
module attributes {stable_mosaic.version = 11 : i64} {
  func.func @_mlp_kernel(%arg0: i32, %arg1: memref<8x256xf32, #tpu.memory_space<vmem>>, %arg2: memref<64x8xf32, #tpu.memory_space<vmem>>, %arg3: memref<64x1xf32, #tpu.memory_space<vmem>>, %arg4: memref<8x64xf32, #tpu.memory_space<vmem>>, %arg5: memref<8x1xf32, #tpu.memory_space<vmem>>, %arg6: memref<8x256xf32, #tpu.memory_space<vmem>>) attributes {dimension_semantics = [#tpu.dimension_semantics<parallel>], iteration_bounds = array<i64: 1>, scalar_prefetch = 0 : i64, scratch_operands = 0 : i64, tpu.core_type = #tpu.core_type<tc>, window_params = [{transform_indices = @transform_0, window_bounds = array<i64: 8, 256>}, {pipeline_mode = #tpu.pipeline_mode<synchronous>, transform_indices = @transform_1, window_bounds = array<i64: 64, 8>}, {pipeline_mode = #tpu.pipeline_mode<synchronous>, transform_indices = @transform_2, window_bounds = array<i64: 64, 1>}, {pipeline_mode = #tpu.pipeline_mode<synchronous>, transform_indices = @transform_3, window_bounds = array<i64: 8, 64>}, {pipeline_mode = #tpu.pipeline_mode<synchronous>, transform_indices = @transform_4, window_bounds = array<i64: 8, 1>}, {transform_indices = @transform_5, window_bounds = array<i64: 8, 256>}]} {
    %c0 = arith.constant 0 : index
    %c0_0 = arith.constant 0 : index
    %0 = vector.load %arg1[%c0, %c0_0] : memref<8x256xf32, #tpu.memory_space<vmem>>, vector<8x256xf32>
    %c0_1 = arith.constant 0 : index
    %c0_2 = arith.constant 0 : index
    %1 = vector.load %arg2[%c0_1, %c0_2] : memref<64x8xf32, #tpu.memory_space<vmem>>, vector<64x8xf32>
    %cst = arith.constant dense<0.000000e+00> : vector<64x256xf32>
    %2 = tpu.matmul %1, %0, %cst {dimension_numbers = #tpu.dot_dimension_numbers<[1], [0], [0], [1], [0, 0, 1, 1], [], []>} : vector<64x8xf32>, vector<8x256xf32>, vector<64x256xf32> -> vector<64x256xf32>
    %c0_3 = arith.constant 0 : index
    %c0_4 = arith.constant 0 : index
    %3 = vector.load %arg3[%c0_3, %c0_4] : memref<64x1xf32, #tpu.memory_space<vmem>>, vector<64x1xf32>
    %4 = vector.broadcast %3 : vector<64x1xf32> to vector<64x256xf32>
    %5 = arith.addf %2, %4 : vector<64x256xf32>
    %cst_5 = arith.constant 0.000000e+00 : f32
    %6 = vector.broadcast %cst_5 : f32 to vector<64x256xf32>
    %7 = arith.maximumf %5, %6 : vector<64x256xf32>
    %c0_6 = arith.constant 0 : index
    %c0_7 = arith.constant 0 : index
    %8 = vector.load %arg4[%c0_6, %c0_7] : memref<8x64xf32, #tpu.memory_space<vmem>>, vector<8x64xf32>
    %cst_8 = arith.constant dense<0.000000e+00> : vector<8x256xf32>
    %9 = tpu.matmul %8, %7, %cst_8 {dimension_numbers = #tpu.dot_dimension_numbers<[1], [0], [0], [1], [0, 0, 1, 1], [], []>} : vector<8x64xf32>, vector<64x256xf32>, vector<8x256xf32> -> vector<8x256xf32>
    %c0_9 = arith.constant 0 : index
    %c0_10 = arith.constant 0 : index
    %10 = vector.load %arg5[%c0_9, %c0_10] : memref<8x1xf32, #tpu.memory_space<vmem>>, vector<8x1xf32>
    %11 = vector.broadcast %10 : vector<8x1xf32> to vector<8x256xf32>
    %12 = arith.addf %9, %11 : vector<8x256xf32>
    %c0_11 = arith.constant 0 : index
    %c0_12 = arith.constant 0 : index
    %13 = vector.load %arg6[%c0_11, %c0_12] : memref<8x256xf32, #tpu.memory_space<vmem>>, vector<8x256xf32>
    tpu.vector_store %arg6[%c0_11, %c0_12], %12 {strides = array<i32>} : memref<8x256xf32, #tpu.memory_space<vmem>>, vector<8x256xf32>,
    return
  }
  func.func @transform_0(%arg0: i32) -> (i32, i32) {
    %c0_i32 = arith.constant 0 : i32
    %c0_i32_0 = arith.constant 0 : i32
    return %c0_i32, %arg0 : i32, i32
  }
  func.func @transform_1(%arg0: i32) -> (i32, i32) {
    %c0_i32 = arith.constant 0 : i32
    %c0_i32_0 = arith.constant 0 : i32
    %c0_i32_1 = arith.constant 0 : i32
    return %c0_i32, %c0_i32_0 : i32, i32
  }
  func.func @transform_2(%arg0: i32) -> (i32, i32) {
    %c0_i32 = arith.constant 0 : i32
    %c0_i32_0 = arith.constant 0 : i32
    %c0_i32_1 = arith.constant 0 : i32
    return %c0_i32, %c0_i32_0 : i32, i32
  }
  func.func @transform_3(%arg0: i32) -> (i32, i32) {
    %c0_i32 = arith.constant 0 : i32
    %c0_i32_0 = arith.constant 0 : i32
    %c0_i32_1 = arith.constant 0 : i32
    return %c0_i32, %c0_i32_0 : i32, i32
  }
  func.func @transform_4(%arg0: i32) -> (i32, i32) {
    %c0_i32 = arith.constant 0 : i32
    %c0_i32_0 = arith.constant 0 : i32
    %c0_i32_1 = arith.constant 0 : i32
    return %c0_i32, %c0_i32_0 : i32, i32
  }
  func.func @transform_5(%arg0: i32) -> (i32, i32) {
    %c0_i32 = arith.constant 0 : i32
    %c0_i32_0 = arith.constant 0 : i32
    return %c0_i32, %arg0 : i32, i32
  }
}

</mosaic_0001>

<llo_original>
// kernel: tpu_custom_call.1
$region0: #{tpu_custom_call.1}
  #allocation0 [shape = 'u32[]', space=smem, size = 0x4, offset = 0x4, fixed_abs, tag = 'smem constant byte address 0x4 - core index']
  #allocation1 [shape = 'u32[144,128]{1,0:T(1,128)}', space=vmem, size = 0x12000, scoped, tag = 'internal scratch']
  %s0 = inlined_call_operand.vmem [shape: f32[8,256], index: 0, kind: input, shape index: {}]
  %s1 = inlined_call_operand.vmem [shape: f32[64,8], index: 1, kind: input, shape index: {}]
  %s2 = inlined_call_operand.vmem [shape: f32[64,1], index: 2, kind: input, shape index: {}]
  %s3 = inlined_call_operand.vmem [shape: f32[8,64], index: 3, kind: input, shape index: {}]
  %s4 = inlined_call_operand.vmem [shape: f32[8,1], index: 4, kind: input, shape index: {}]
  %s5 = inlined_call_operand.hbm [shape: f32[8,256], index: 5, kind: output, shape index: {}]
  %s6 = sld [smem:[#allocation0]]
  $region30: #{tpu_custom_call.1} parent=0
    _
  %s8 = ssub.s32 1, %s6
  %s9 = scalar_select 0, %s8, %s6
  $region1: #{tpu_custom_call.1} parent=0
    #allocation2 [shape = 'u8[8192]{0}', space=vmem, size = 0x2000, scoped, tag = 'output window, operand 0, single buffered']
    #allocation3 [shape = 's32[1]{0}', space=sflag, size = 0x4, scoped, tag = 'scoped memory for tpu_custom_call.1']
    %10 = vsyncpa [#allocation3], 0
    // Predicated region
    $region2: #{tpu_custom_call.1} parent=1 // pred_check
      _
    $region3: #{tpu_custom_call.1} parent=1 // pred_check_branch
      %12 = sbr.rel (0) target = $region5
    $region4: #{tpu_custom_call.1} parent=1 // pred_region
      _
    $region5: #{tpu_custom_call.1} parent=1 // pred_fallthru
      _
    // Predicated region
    $region6: #{tpu_custom_call.1} parent=1 // pred_check
      _
    $region7: #{tpu_custom_call.1} parent=1 // pred_check_branch
      %14 = sbr.rel (0) target = $region9
    $region8: #{tpu_custom_call.1} parent=1 // pred_region
      _
    $region9: #{tpu_custom_call.1} parent=1 // pred_fallthru
      _
    // Predicated region
    $region10: #{tpu_custom_call.1} parent=1 // pred_check
      _
    $region11: #{tpu_custom_call.1} parent=1 // pred_check_branch
      %16 = sbr.rel (0) target = $region13
    $region12: #{tpu_custom_call.1} parent=1 // pred_region
      _
    $region13: #{tpu_custom_call.1} parent=1 // pred_fallthru
      _
    // Predicated region
    $region14: #{tpu_custom_call.1} parent=1 // pred_check
      _
    $region15: #{tpu_custom_call.1} parent=1 // pred_check_branch
      %18 = sbr.rel (0) target = $region17
    $region16: #{tpu_custom_call.1} parent=1 // pred_region
      _
    $region17: #{tpu_custom_call.1} parent=1 // pred_fallthru
      _
    // Predicated region
    $region18: #{tpu_custom_call.1} parent=1 // pred_check
      _
    $region19: #{tpu_custom_call.1} parent=1 // pred_check_branch
      %20 = sbr.rel (0) target = $region21
    $region20: #{tpu_custom_call.1} parent=1 // pred_region
      _
    $region21: #{tpu_custom_call.1} parent=1 // pred_fallthru
      _
    %v21 = vld [vmem:[%s0] sm:$0xff]
    %v22 = vld [vmem:[%s0 + $0x8] sm:$0xff]
    %v23 = vld [vmem:[%s1] sm:$0xff]
    %v24 = vld [vmem:[%s1 + $0x8] sm:$0xff]
    %v25 = vld [vmem:[%s1 + $0x10] sm:$0xff]
    %v26 = vld [vmem:[%s1 + $0x18] sm:$0xff]
    %v27 = vld [vmem:[%s1 + $0x20] sm:$0xff]
    %v28 = vld [vmem:[%s1 + $0x28] sm:$0xff]
    %v29 = vld [vmem:[%s1 + $0x30] sm:$0xff]
    %v30 = vld [vmem:[%s1 + $0x38] sm:$0xff]
    %v31 = vld [vmem:[%s2] sm:$0xff]
    %v32 = vld [vmem:[%s2 + $0x8] sm:$0xff]
    %v33 = vld [vmem:[%s2 + $0x10] sm:$0xff]
    %v34 = vld [vmem:[%s2 + $0x18] sm:$0xff]
    %v35 = vld [vmem:[%s2 + $0x20] sm:$0xff]
    %v36 = vld [vmem:[%s2 + $0x28] sm:$0xff]
    %v37 = vld [vmem:[%s2 + $0x30] sm:$0xff]
    %v38 = vld [vmem:[%s2 + $0x38] sm:$0xff]
    %40 = vset.pattern.permute.xlu0 0
    %41 = vperm.xlu0 %40, %v31
    %v42 = vpop.permute.xlu0 %41
    %45 = vset.pattern.permute.xlu0 0
    %46 = vperm.xlu0 %45, %v32
    %v47 = vpop.permute.xlu0 %46
    %50 = vset.pattern.permute.xlu0 0
    %51 = vperm.xlu0 %50, %v33
    %v52 = vpop.permute.xlu0 %51
    %55 = vset.pattern.permute.xlu0 0
    %56 = vperm.xlu0 %55, %v34
    %v57 = vpop.permute.xlu0 %56
    %60 = vset.pattern.permute.xlu0 0
    %61 = vperm.xlu0 %60, %v35
    %v62 = vpop.permute.xlu0 %61
    %65 = vset.pattern.permute.xlu0 0
    %66 = vperm.xlu0 %65, %v36
    %v67 = vpop.permute.xlu0 %66
    %70 = vset.pattern.permute.xlu0 0
    %71 = vperm.xlu0 %70, %v37
    %v72 = vpop.permute.xlu0 %71
    %75 = vset.pattern.permute.xlu0 0
    %76 = vperm.xlu0 %75, %v38
    %v77 = vpop.permute.xlu0 %76
    %vm79 = vcmask 64512
    %v81 = vsel %vm79, %v23, 0
    %v84 = vsel %vm79, %v24, 0
    %v87 = vsel %vm79, %v25, 0
    %v90 = vsel %vm79, %v26, 0
    %v93 = vsel %vm79, %v27, 0
    %v96 = vsel %vm79, %v28, 0
    %v99 = vsel %vm79, %v29, 0
    %v102 = vsel %vm79, %v30, 0
    %104 = vmatprep.subr.mxu0 %v22
    %105 = vmatpush1.msra.mxu0 %v21
    %106 = vmatprep.subr.mxu0 0.0
    %107 = vmatpush1.msra.mxu0 0.0
    %108 = vmatprep.subr.mxu0 0.0
    %109 = vmatpush1.msra.mxu0 0.0
    %110 = vmatprep.subr.mxu0 0.0
    %111 = vmatpush1.msra.mxu0 0.0
    %112 = vmatprep.subr.mxu0 0.0
    %113 = vmatpush1.msra.mxu0 0.0
    %114 = vmatprep.subr.mxu0 0.0
    %115 = vmatpush1.msra.mxu0 0.0
    %116 = vmatprep.subr.mxu0 0.0
    %117 = vmatpush1.msra.mxu0 0.0
    %118 = vmatprep.subr.mxu0 0.0
    %119 = vmatpush1.msra.mxu0 0.0
    %120 = vmatprep.subr.mxu0 0.0
    %121 = vmatpush1.msra.mxu0 0.0
    %122 = vmatprep.subr.mxu0 0.0
    %123 = vmatpush1.msra.mxu0 0.0
    %124 = vmatprep.subr.mxu0 0.0
    %125 = vmatpush1.msra.mxu0 0.0
    %126 = vmatprep.subr.mxu0 0.0
    %127 = vmatpush1.msra.mxu0 0.0
    %128 = vmatprep.subr.mxu0 0.0
    %129 = vmatpush1.msra.mxu0 0.0
    %130 = vmatprep.subr.mxu0 0.0
    %131 = vmatpush1.msra.mxu0 0.0
    %132 = vmatprep.subr.mxu0 0.0
    %133 = vmatpush1.msra.mxu0 0.0
    %134 = vmatprep.subr.mxu0 0.0
    %135 = vmatpush1.msra.mxu0 0.0
    %136 = vmatprep.subr.mxu0 0.0
    %137 = vmatpush1.msra.mxu0 0.0
    %138 = vmatprep.subr.mxu0 0.0
    %139 = vmatpush1.msra.mxu0 0.0
    %140 = vmatprep.subr.mxu0 0.0
    %141 = vmatpush1.msra.mxu0 0.0
    %142 = vmatprep.subr.mxu0 0.0
    %143 = vmatpush1.msra.mxu0 0.0
    %144 = vmatprep.subr.mxu0 0.0
    %145 = vmatpush1.msra.mxu0 0.0
    %146 = vmatprep.subr.mxu0 0.0
    %147 = vmatpush1.msra.mxu0 0.0
    %148 = vmatprep.subr.mxu0 0.0
    %149 = vmatpush1.msra.mxu0 0.0
    %150 = vmatprep.subr.mxu0 0.0
    %151 = vmatpush1.msra.mxu0 0.0
    %152 = vmatprep.subr.mxu0 0.0
    %153 = vmatpush1.msra.mxu0 0.0
    %154 = vmatprep.subr.mxu0 0.0
    %155 = vmatpush1.msra.mxu0 0.0
    %156 = vmatprep.subr.mxu0 0.0
    %157 = vmatpush1.msra.mxu0 0.0
    %158 = vmatprep.subr.mxu0 0.0
    %159 = vmatpush1.msra.mxu0 0.0
    %160 = vmatprep.subr.mxu0 0.0
    %161 = vmatpush1.msra.mxu0 0.0
    %162 = vmatprep.subr.mxu0 0.0
    %163 = vmatpush1.msra.mxu0 0.0
    %164 = vmatprep.subr.mxu0 0.0
    %165 = vmatpush1.msra.mxu0 0.0
    %166 = vmatprep.subr.mxu0 0.0
    %167 = vmatpush1.msra.mxu0 0.0
    %168 = vmatprep.mubr.f32.mxu0 0.0
    %169 = vmatmul.mubr.f32.gmra.mrb[0].mxu0 %v81
    %v170 = vpop.f32.mrb[0].mxu0
    %v171 = vadd.f32 %v42, %v170
    %v172 = vpop.f32.mrb[0].mxu0
    %v173 = vadd.f32 %v42, %v172
    %174 = vmatprep.mubr.f32.mxu0 0.0
    %175 = vmatmul.mubr.f32.gmra.mrb[0].mxu0 %v84
    %v176 = vpop.f32.mrb[0].mxu0
    %v177 = vadd.f32 %v47, %v176
    %v178 = vpop.f32.mrb[0].mxu0
    %v179 = vadd.f32 %v47, %v178
    %180 = vmatprep.mubr.f32.mxu0 0.0
    %181 = vmatmul.mubr.f32.gmra.mrb[0].mxu0 %v87
    %v182 = vpop.f32.mrb[0].mxu0
    %v183 = vadd.f32 %v52, %v182
    %v184 = vpop.f32.mrb[0].mxu0
    %v185 = vadd.f32 %v52, %v184
    %186 = vmatprep.mubr.f32.mxu0 0.0
    %187 = vmatmul.mubr.f32.gmra.mrb[0].mxu0 %v90
    %v188 = vpop.f32.mrb[0].mxu0
    %v189 = vadd.f32 %v57, %v188
    %v190 = vpop.f32.mrb[0].mxu0
    %v191 = vadd.f32 %v57, %v190
    %192 = vmatprep.mubr.f32.mxu0 0.0
    %193 = vmatmul.mubr.f32.gmra.mrb[0].mxu0 %v93
    %v194 = vpop.f32.mrb[0].mxu0
    %v195 = vadd.f32 %v62, %v194
    %v196 = vpop.f32.mrb[0].mxu0
    %v197 = vadd.f32 %v62, %v196
    %198 = vmatprep.mubr.f32.mxu0 0.0
    %199 = vmatmul.mubr.f32.gmra.mrb[0].mxu0 %v96
    %v200 = vpop.f32.mrb[0].mxu0
    %v201 = vadd.f32 %v67, %v200
    %v202 = vpop.f32.mrb[0].mxu0
    %v203 = vadd.f32 %v67, %v202
    %204 = vmatprep.mubr.f32.mxu0 0.0
    %205 = vmatmul.mubr.f32.gmra.mrb[0].mxu0 %v99
    %v206 = vpop.f32.mrb[0].mxu0
    %v207 = vadd.f32 %v72, %v206
    %v208 = vpop.f32.mrb[0].mxu0
    %v209 = vadd.f32 %v72, %v208
    %210 = vmatprep.mubr.f32.mxu0 0.0
    %211 = vmatmul.mubr.f32.gmra.mrb[0].mxu0 %v102
    %v212 = vpop.f32.mrb[0].mxu0
    %v213 = vadd.f32 %v77, %v212
    %v214 = vpop.f32.mrb[0].mxu0
    %v215 = vadd.f32 %v77, %v214
    %216 = vdwg.mxu0
    %v217 = vmax.f32 %v171, 0.0
    %v218 = vmax.f32 %v173, 0.0
    %v219 = vmax.f32 %v177, 0.0
    %v220 = vmax.f32 %v179, 0.0
    %v221 = vmax.f32 %v183, 0.0
    %v222 = vmax.f32 %v185, 0.0
    %v223 = vmax.f32 %v189, 0.0
    %v224 = vmax.f32 %v191, 0.0
    %v225 = vmax.f32 %v195, 0.0
    %v226 = vmax.f32 %v197, 0.0
    %v227 = vmax.f32 %v201, 0.0
    %v228 = vmax.f32 %v203, 0.0
    %v229 = vmax.f32 %v207, 0.0
    %v230 = vmax.f32 %v209, 0.0
    %v231 = vmax.f32 %v213, 0.0
    %v232 = vmax.f32 %v215, 0.0
    %v233 = vld [vmem:[%s3] sm:$0xff]
    %v234 = vld [vmem:[%s4] sm:$0xff]
    %236 = vset.pattern.permute.xlu0 0
    %237 = vperm.xlu0 %236, %v234
    %v238 = vpop.permute.xlu0 %237
    %vm240 = vcmask 523264
    %v242 = vsel %vm240, %v233, 0
    %244 = vmatprep.subr.mxu0 %v218
    %245 = vmatpush1.msra.mxu0 %v217
    %246 = vmatprep.subr.mxu0 %v220
    %247 = vmatpush1.msra.mxu0 %v219
    %248 = vmatprep.subr.mxu0 %v222
    %249 = vmatpush1.msra.mxu0 %v221
    %250 = vmatprep.subr.mxu0 %v224
    %251 = vmatpush1.msra.mxu0 %v223
    %252 = vmatprep.subr.mxu0 %v226
    %253 = vmatpush1.msra.mxu0 %v225
    %254 = vmatprep.subr.mxu0 %v228
    %255 = vmatpush1.msra.mxu0 %v227
    %256 = vmatprep.subr.mxu0 %v230
    %257 = vmatpush1.msra.mxu0 %v229
    %258 = vmatprep.subr.mxu0 %v232
    %259 = vmatpush1.msra.mxu0 %v231
    %260 = vmatprep.subr.mxu0 0.0
    %261 = vmatpush1.msra.mxu0 0.0
    %262 = vmatprep.subr.mxu0 0.0
    %263 = vmatpush1.msra.mxu0 0.0
    %264 = vmatprep.subr.mxu0 0.0
    %265 = vmatpush1.msra.mxu0 0.0
    %266 = vmatprep.subr.mxu0 0.0
    %267 = vmatpush1.msra.mxu0 0.0
    %268 = vmatprep.subr.mxu0 0.0
    %269 = vmatpush1.msra.mxu0 0.0
    %270 = vmatprep.subr.mxu0 0.0
    %271 = vmatpush1.msra.mxu0 0.0
    %272 = vmatprep.subr.mxu0 0.0
    %273 = vmatpush1.msra.mxu0 0.0
    %274 = vmatprep.subr.mxu0 0.0
    %275 = vmatpush1.msra.mxu0 0.0
    %276 = vmatprep.subr.mxu0 0.0
    %277 = vmatpush1.msra.mxu0 0.0
    %278 = vmatprep.subr.mxu0 0.0
    %279 = vmatpush1.msra.mxu0 0.0
    %280 = vmatprep.subr.mxu0 0.0
    %281 = vmatpush1.msra.mxu0 0.0
    %282 = vmatprep.subr.mxu0 0.0
    %283 = vmatpush1.msra.mxu0 0.0
    %284 = vmatprep.subr.mxu0 0.0
    %285 = vmatpush1.msra.mxu0 0.0
    %286 = vmatprep.subr.mxu0 0.0
    %287 = vmatpush1.msra.mxu0 0.0
    %288 = vmatprep.subr.mxu0 0.0
    %289 = vmatpush1.msra.mxu0 0.0
    %290 = vmatprep.subr.mxu0 0.0
    %291 = vmatpush1.msra.mxu0 0.0
    %292 = vmatprep.subr.mxu0 0.0
    %293 = vmatpush1.msra.mxu0 0.0
    %294 = vmatprep.subr.mxu0 0.0
    %295 = vmatpush1.msra.mxu0 0.0
    %296 = vmatprep.subr.mxu0 0.0
    %297 = vmatpush1.msra.mxu0 0.0
    %298 = vmatprep.subr.mxu0 0.0
    %299 = vmatpush1.msra.mxu0 0.0
    %300 = vmatprep.subr.mxu0 0.0
    %301 = vmatpush1.msra.mxu0 0.0
    %302 = vmatprep.subr.mxu0 0.0
    %303 = vmatpush1.msra.mxu0 0.0
    %304 = vmatprep.subr.mxu0 0.0
    %305 = vmatpush1.msra.mxu0 0.0
    %306 = vmatprep.subr.mxu0 0.0
    %307 = vmatpush1.msra.mxu0 0.0
    %308 = vmatprep.mubr.f32.mxu0 0.0
    %309 = vmatmul.mubr.f32.gmra.mrb[0].mxu0 %v242
    %v310 = vpop.f32.mrb[0].mxu0
    %v311 = vadd.f32 %v238, %v310
    %v312 = vpop.f32.mrb[0].mxu0
    %v313 = vadd.f32 %v238, %v312
    %314 = vdwg.mxu0
    %315 = vst [vmem:[#allocation2] sm:$0xff] %v311
    %316 = vst [vmem:[#allocation2 + $0x8] sm:$0xff] %v313
    // Predicated region
    $region22: #{tpu_custom_call.1} parent=1 // pred_check
      _
    $region23: #{tpu_custom_call.1} parent=1 // pred_check_branch
      %318 = sbr.rel (0) target = $region25
    $region24: #{tpu_custom_call.1} parent=1 // pred_region
      %s320 = ssub.s32 256, 256
      %321 = vsyncadd [#allocation3], %s320
      %s323 = sshll.u32 [#allocation2], 4
      %s324 = int_to_ptr.vmem [resolvable:$true] %s323
      %326 = dma.vmem_to_hbm [thread:$0]  %s324, 256, %s5, [#allocation3]
    $region25: #{tpu_custom_call.1} parent=1 // pred_fallthru
      _
    // Predicated region
    $region26: #{tpu_custom_call.1} parent=1 // pred_check
      _
    $region27: #{tpu_custom_call.1} parent=1 // pred_check_branch
      %328 = sbr.rel (0) target = $region29
    $region28: #{tpu_custom_call.1} parent=1 // pred_region
      %329 = dma.done [#allocation3], 256
    $region29: #{tpu_custom_call.1} parent=1 // pred_fallthru
      _
    %330 = vsyncpa [#allocation3], 1

</llo_original>
